<compile_context>
chip_gen: v7x
topology: tpu7x:2x2x1
jax: 0.10.0
libtpu: 0.0.40
codegen_flags: <defaults>
</compile_context>

<pallas_src>
import functools

import jax
import jax.numpy as jnp
from jax.experimental import pallas as pl
from jax.experimental.pallas import tpu as pltpu

EPS = 1e-5


# ----------------------------------------------------------------------------------
# Parameter preparation (build ONCE, cache next to the params — not per call).
# ----------------------------------------------------------------------------------
def prepare_params(params):
    """Builds the kernel-side constants from PyTorch-layout parameters."""
    out_dim = params["w1"].shape[0]
    two_f = 2 * out_dim
    # Fused first-layer weight: [W1^T | Ws^T] -> (in_dim, 2*out_dim), bf16 (MXU-native).
    wc = jnp.concatenate([params["w1"].T, params["ws"].T], axis=1).astype(jnp.bfloat16)
    # Second-layer weight zero-padded along K to (2*out_dim, out_dim) so it consumes the
    # fused activation block directly (the relu'd shortcut half only multiplies zeros).
    w2p = jnp.concatenate(
        [params["w2"].T, jnp.zeros((out_dim, out_dim), params["w2"].dtype)], axis=0
    ).astype(jnp.bfloat16)

    gamma_c = jnp.concatenate([params["g1"], params["gs"]])
    beta_c = jnp.concatenate([params["be1"], params["bes"]])

    # Packed BN affines for the fused single-block kernel, padded to 8 sublanes:
    #   row 0: [gamma1 | gamma_s]   row 1: [beta1 | beta_s]
    #   row 2: [gamma2 | 0]         row 3: [beta2 | 0]
    pk = jnp.zeros((8, two_f), jnp.float32)
    pk = pk.at[0].set(gamma_c).at[1].set(beta_c)
    pk = pk.at[2, :out_dim].set(params["g2"]).at[3, :out_dim].set(params["be2"])

    return dict(
        wc=wc, w2p=w2p, pk=pk,
        gamma_c=gamma_c, beta_c=beta_c,
        gamma2=params["g2"], beta2=params["be2"],
    )


# ----------------------------------------------------------------------------------
# Fused single-block kernel (small batch: whole batch resident in VMEM, one launch).
# ----------------------------------------------------------------------------------
def _fused_kernel(x_ref, wc_ref, w2p_ref, p_ref, o_ref, *, out_dim):
    # In-kernel bf16 cast (hides under the MXU; no wrapper cast / extra HBM traffic).
    x = x_ref[...].astype(wc_ref.dtype)

    # Fused main + shortcut matmul: (B, 2*out_dim), f32 accumulation on MXU.
    hc = jnp.dot(x, wc_ref[...], preferred_element_type=jnp.float32)
    inv_n = 1.0 / hc.shape[0]

    # Single-pass BN stats (f32): var = E[h^2] - mu^2.
    mu = jnp.sum(hc, axis=0, keepdims=True) * inv_n
    var = jnp.sum(hc * hc, axis=0, keepdims=True) * inv_n - mu * mu
    scale_c = p_ref[0:1, :] * jax.lax.rsqrt(var + EPS)
    shift_c = p_ref[1:2, :] - mu * scale_c
    bnc = hc * scale_c + shift_c                       # joint BN over [main | shortcut]

    residual = bnc[:, out_dim:]                        # shortcut branch (no relu)

    # Main branch: relu then second matmul; zero-padded W2 makes the shortcut half inert.
    a = jnp.maximum(bnc, 0.0).astype(w2p_ref.dtype)
    h2 = jnp.dot(a, w2p_ref[...], preferred_element_type=jnp.float32)

    mu2 = jnp.sum(h2, axis=0, keepdims=True) * inv_n
    var2 = jnp.sum(h2 * h2, axis=0, keepdims=True) * inv_n - mu2 * mu2
    scale2 = p_ref[2:3, :out_dim] * jax.lax.rsqrt(var2 + EPS)
    shift2 = p_ref[3:4, :out_dim] - mu2 * scale2

    o_ref[...] = jnp.maximum(h2 * scale2 + shift2 + residual, 0.0)


def residual_block_fused(x, prep):
    """Single-block path: whole batch in one VMEM block (small B)."""
    B, _ = x.shape
    out_dim = prep["w2p"].shape[1]
    vmem = pl.BlockSpec(memory_space=pltpu.MemorySpace.VMEM)
    return pl.pallas_call(
        functools.partial(_fused_kernel, out_dim=out_dim),
        out_shape=jax.ShapeDtypeStruct((B, out_dim), jnp.float32),
        in_specs=[vmem, vmem, vmem, vmem],
        out_specs=vmem,
    )(x, prep["wc"], prep["w2p"], prep["pk"])


# ----------------------------------------------------------------------------------
# Batch-tiled path with exact full-batch BN (two-phase statistics), for large B.
#   pass 1: hc = x @ [W1|Ws]; per-tile partial (sum, sumsq) of hc
#   (XLA)  : combine partials -> scale_c / shift_c
#   pass 2: bnc = hc*scale+shift; h2 = relu(bnc) @ W2pad; per-tile partial stats of h2
#   (XLA)  : combine partials -> scale2 / shift2
#   pass 3: out = relu(h2*scale2+shift2 + bn_shortcut(hc))
# Batch axis is "parallel" in every pass (no cross-tile accumulation in-kernel), so it
# shards across v7x's two TensorCores; weights/affines stay resident via index_map (0,0).
# ----------------------------------------------------------------------------------
def _p1_kernel(x_ref, wc_ref, hc_ref, st_ref):
    x = x_ref[...].astype(wc_ref.dtype)
    hc = jnp.dot(x, wc_ref[...], preferred_element_type=jnp.float32)
    hc_ref[...] = hc
    s = jnp.sum(hc, axis=0, keepdims=True)
    ss = jnp.sum(hc * hc, axis=0, keepdims=True)
    st_ref[...] = jnp.concatenate(
        [s, ss, jnp.zeros((6, hc.shape[1]), jnp.float32)], axis=0)


def _p2_kernel(hc_ref, w2p_ref, ab_ref, h2_ref, st_ref):
    hc = hc_ref[...]
    bnc = hc * ab_ref[0:1, :] + ab_ref[1:2, :]
    a = jnp.maximum(bnc, 0.0).astype(w2p_ref.dtype)
    h2 = jnp.dot(a, w2p_ref[...], preferred_element_type=jnp.float32)
    h2_ref[...] = h2
    s = jnp.sum(h2, axis=0, keepdims=True)
    ss = jnp.sum(h2 * h2, axis=0, keepdims=True)
    st_ref[...] = jnp.concatenate(
        [s, ss, jnp.zeros((6, h2.shape[1]), jnp.float32)], axis=0)


def _p3_kernel(hc_ref, h2_ref, ab_ref, o_ref, *, out_dim):
    residual = hc_ref[:, out_dim:] * ab_ref[0:1, out_dim:] + ab_ref[1:2, out_dim:]
    out = h2_ref[...] * ab_ref[2:3, :out_dim] + ab_ref[3:4, :out_dim] + residual
    o_ref[...] = jnp.maximum(out, 0.0)


def _finalize_scale_shift(s, ss, n, gamma, beta):
    """Full-batch BN scale/shift from accumulated sum / sum-of-squares (f32)."""
    mu = s / n
    var = ss / n - mu * mu
    scale = gamma * jax.lax.rsqrt(var + EPS)
    shift = beta - mu * scale
    return scale, shift


def _pick_tile(batch, tb):
    """Largest multiple-of-8 divisor of `batch` that is <= tb (else the full batch)."""
    tb = max(8, min(tb, batch))
    best = None
    for d in range(8, batch + 1, 8):
        if batch % d == 0 and d <= tb:
            best = d
    return best if best is not None else batch


def residual_block_tiled(x, prep, tb=1024):
    """Batch-tiled path with exact full-batch BN statistics (training mode)."""
    B, in_dim = x.shape
    wc, w2p = prep["wc"], prep["w2p"]
    out_dim = w2p.shape[1]
    two_f = wc.shape[1]

    tb = _pick_tile(B, tb)
    num_tiles = B // tb

    cp = pltpu.CompilerParams(
        dimension_semantics=("parallel",),
        vmem_limit_bytes=32 * 1024 * 1024,   # explicit: safe on v7x's smaller VMEM
    )

    # ---- pass 1: first (fused) matmul + partial stats ---------------------------
    hc, st1 = pl.pallas_call(
        _p1_kernel,
        grid=(num_tiles,),
        in_specs=[
            pl.BlockSpec((tb, in_dim), lambda i: (i, 0)),
            pl.BlockSpec((in_dim, two_f), lambda i: (0, 0)),      # resident weight
        ],
        out_specs=[
            pl.BlockSpec((tb, two_f), lambda i: (i, 0)),
            pl.BlockSpec((8, two_f), lambda i: (i, 0)),           # per-tile partials
        ],
        out_shape=[
            jax.ShapeDtypeStruct((B, two_f), jnp.float32),
            jax.ShapeDtypeStruct((num_tiles * 8, two_f), jnp.float32),
        ],
        compiler_params=cp,
    )(x, wc)

    st1 = st1.reshape(num_tiles, 8, two_f)
    scale_c, shift_c = _finalize_scale_shift(
        st1[:, 0, :].sum(axis=0), st1[:, 1, :].sum(axis=0), B,
        prep["gamma_c"], prep["beta_c"])
    ab1 = jnp.zeros((8, two_f), jnp.float32).at[0].set(scale_c).at[1].set(shift_c)

    # ---- pass 2: apply BN1/BNs, relu, second matmul + partial stats --------------
    h2, st2 = pl.pallas_call(
        _p2_kernel,
        grid=(num_tiles,),
        in_specs=[
            pl.BlockSpec((tb, two_f), lambda i: (i, 0)),
            pl.BlockSpec((two_f, out_dim), lambda i: (0, 0)),     # resident weight
            pl.BlockSpec((8, two_f), lambda i: (0, 0)),           # resident affines
        ],
        out_specs=[
            pl.BlockSpec((tb, out_dim), lambda i: (i, 0)),
            pl.BlockSpec((8, out_dim), lambda i: (i, 0)),
        ],
        out_shape=[
            jax.ShapeDtypeStruct((B, out_dim), jnp.float32),
            jax.ShapeDtypeStruct((num_tiles * 8, out_dim), jnp.float32),
        ],
        compiler_params=cp,
    )(hc, w2p, ab1)

    st2 = st2.reshape(num_tiles, 8, out_dim)
    scale2, shift2 = _finalize_scale_shift(
        st2[:, 0, :].sum(axis=0), st2[:, 1, :].sum(axis=0), B,
        prep["gamma2"], prep["beta2"])
    ab2 = ab1.at[2, :out_dim].set(scale2).at[3, :out_dim].set(shift2)

    # ---- pass 3: BN2 + shortcut BN + residual add + relu -------------------------
    # TODO(synk): emit bf16 / lane-dense output here if the downstream consumer allows it
    # (halves the dominant HBM store stream at large B).
    out = pl.pallas_call(
        functools.partial(_p3_kernel, out_dim=out_dim),
        grid=(num_tiles,),
        in_specs=[
            pl.BlockSpec((tb, two_f), lambda i: (i, 0)),
            pl.BlockSpec((tb, out_dim), lambda i: (i, 0)),
            pl.BlockSpec((8, two_f), lambda i: (0, 0)),
        ],
        out_specs=pl.BlockSpec((tb, out_dim), lambda i: (i, 0)),
        out_shape=jax.ShapeDtypeStruct((B, out_dim), jnp.float32),
        compiler_params=cp,
    )(hc, h2, ab2)
    return out


def residual_block(x, prep, *, tb=1024, fused_max_batch=1024):
    """Dispatch: small batches -> single fused kernel; large batches -> tiled path."""
    if x.shape[0] <= fused_max_batch:
        return residual_block_fused(x, prep)
    return residual_block_tiled(x, prep, tb=tb)


# ----------------------------------------------------------------------------------
# Parameter init (PyTorch-layout) and references.
# ----------------------------------------------------------------------------------
def init_params(key, in_dim, out_dim):
    k1, k2, k3, k4, k5, k6 = jax.random.split(key, 6)

    def linear(kw, kb, fan_in, fan_out):
        bound = 1.0 / jnp.sqrt(fan_in)
        w = jax.random.uniform(kw, (fan_out, fan_in), jnp.float32, -bound, bound)
        b = jax.random.uniform(kb, (fan_out,), jnp.float32, -bound, bound)
        return w, b

    w1, b1 = linear(k1, k2, in_dim, out_dim)
    w2, b2 = linear(k3, k4, out_dim, out_dim)
    ws, bs = linear(k5, k6, in_dim, out_dim)
    ones = jnp.ones((out_dim,), jnp.float32)
    zeros = jnp.zeros((out_dim,), jnp.float32)
    return dict(
        w1=w1, b1=b1, g1=ones, be1=zeros,
        w2=w2, b2=b2, g2=ones, be2=zeros,
        ws=ws, bs=bs, gs=ones, bes=zeros,
    )


def _ref_matched(x, p):
    """Pure-JAX reference mirroring kernel numerics (bf16 matmul operands, f32 BN,
    single-pass variance, biases dropped since training-mode BN cancels them)."""
    xb = x.astype(jnp.bfloat16)

    def bn(h, g, b):
        mu = h.mean(0, keepdims=True)
        var = (h * h).mean(0, keepdims=True) - mu * mu
        scale = g * jax.lax.rsqrt(var + EPS)
        return h * scale + (b - mu * scale)

    h1 = jnp.dot(xb, p["w1"].T.astype(jnp.bfloat16), preferred_element_type=jnp.float32)
    hs = jnp.dot(xb, p["ws"].T.astype(jnp.bfloat16), preferred_element_type=jnp.float32)
    residual = bn(hs, p["gs"], p["bes"])
    a = jnp.maximum(bn(h1, p["g1"], p["be1"]), 0.0).astype(jnp.bfloat16)
    h2 = jnp.dot(a, p["w2"].T.astype(jnp.bfloat16), preferred_element_type=jnp.float32)
    return jnp.maximum(bn(h2, p["g2"], p["be2"]) + residual, 0.0)


def _ref_pytorch_f32(x, p):
    """Direct f32 transcription of the PyTorch forward (training-mode BN, with biases)."""

    def bn(h, g, b):
        mu = h.mean(0, keepdims=True)
        var = ((h - mu) ** 2).mean(0, keepdims=True)
        return g * (h - mu) / jnp.sqrt(var + EPS) + b

    residual = bn(x @ p["ws"].T + p["bs"], p["gs"], p["bes"])
    out = jax.nn.relu(bn(x @ p["w1"].T + p["b1"], p["g1"], p["be1"]))
    out = bn(out @ p["w2"].T + p["b2"], p["g2"], p["be2"])
    return jax.nn.relu(out + residual)


if __name__ == "__main__":
    B, IN_DIM, OUT_DIM = 8, 32, 64
    key = jax.random.PRNGKey(0)
    kx, kp, kx2 = jax.random.split(key, 3)
    x = jax.random.normal(kx, (B, IN_DIM), jnp.float32)
    params = init_params(kp, IN_DIM, OUT_DIM)
    prep = prepare_params(params)   # built once; reused across every forward call

    # Small-batch fused path.
    out = jax.block_until_ready(residual_block(x, prep))
    assert out.shape == (B, OUT_DIM)
    ref = _ref_matched(x, params)
    assert jnp.allclose(out, ref, atol=1e-3, rtol=1e-3), "fused path mismatch vs matched ref"
    ref32 = _ref_pytorch_f32(x, params)
    assert jnp.allclose(out, ref32, atol=1e-1, rtol=1e-1), "fused path mismatch vs f32 ref"

    # Batch-tiled path (exact full-batch BN via two-phase stats) on a small multi-tile case.
    B2 = 64
    x2 = jax.random.normal(kx2, (B2, IN_DIM), jnp.float32)
    out2 = jax.block_until_ready(residual_block_tiled(x2, prep, tb=32))
    assert out2.shape == (B2, OUT_DIM)
    ref2 = _ref_matched(x2, params)
    assert jnp.allclose(out2, ref2, atol=1e-3, rtol=1e-3), "tiled path mismatch vs matched ref"

    print("KERNEL_OK")
</pallas_src>

<mosaic_0001>
module attributes {stable_mosaic.version = 11 : i64} {
  func.func @_fused_kernel(%arg0: memref<8x32xf32, #tpu.memory_space<vmem>>, %arg1: memref<32x128xbf16, #tpu.memory_space<vmem>>, %arg2: memref<128x64xbf16, #tpu.memory_space<vmem>>, %arg3: memref<8x128xf32, #tpu.memory_space<vmem>>, %arg4: memref<8x64xf32, #tpu.memory_space<vmem>>) attributes {dimension_semantics = [], scalar_prefetch = 0 : i64, scratch_operands = 0 : i64, tpu.core_type = #tpu.core_type<tc>} {
    %c0 = arith.constant 0 : index
    %c0_0 = arith.constant 0 : index
    %0 = vector.load %arg0[%c0, %c0_0] : memref<8x32xf32, #tpu.memory_space<vmem>>, vector<8x32xf32>
    %1 = arith.truncf %0 : vector<8x32xf32> to vector<8x32xbf16>
    %c0_1 = arith.constant 0 : index
    %c0_2 = arith.constant 0 : index
    %2 = vector.load %arg1[%c0_1, %c0_2] : memref<32x128xbf16, #tpu.memory_space<vmem>>, vector<32x128xbf16>
    %cst = arith.constant dense<0.000000e+00> : vector<8x128xf32>
    %3 = tpu.matmul %1, %2, %cst {dimension_numbers = #tpu.dot_dimension_numbers<[1], [0], [0], [1], [0, 0, 1, 1], [], []>} : vector<8x32xbf16>, vector<32x128xbf16>, vector<8x128xf32> -> vector<8x128xf32>
    %cst_3 = arith.constant dense<0.000000e+00> : vector<128xf32>
    %4 = vector.multi_reduction <add>, %3, %cst_3 [0] : vector<8x128xf32> to vector<128xf32>
    %5 = vector.shape_cast %4 : vector<128xf32> to vector<1x128xf32>
    %cst_4 = arith.constant 1.250000e-01 : f32
    %6 = vector.broadcast %cst_4 : f32 to vector<1x128xf32>
    %7 = arith.mulf %5, %6 : vector<1x128xf32>
    %8 = arith.mulf %3, %3 : vector<8x128xf32>
    %cst_5 = arith.constant dense<0.000000e+00> : vector<128xf32>
    %9 = vector.multi_reduction <add>, %8, %cst_5 [0] : vector<8x128xf32> to vector<128xf32>
    %10 = vector.shape_cast %9 : vector<128xf32> to vector<1x128xf32>
    %cst_6 = arith.constant 1.250000e-01 : f32
    %11 = vector.broadcast %cst_6 : f32 to vector<1x128xf32>
    %12 = arith.mulf %10, %11 : vector<1x128xf32>
    %13 = arith.mulf %7, %7 : vector<1x128xf32>
    %14 = arith.subf %12, %13 : vector<1x128xf32>
    %c0_7 = arith.constant 0 : index
    %c0_8 = arith.constant 0 : index
    %15 = vector.load %arg3[%c0_7, %c0_8] : memref<8x128xf32, #tpu.memory_space<vmem>>, vector<1x128xf32>
    %cst_9 = arith.constant 9.99999974E-6 : f32
    %16 = vector.broadcast %cst_9 : f32 to vector<1x128xf32>
    %17 = arith.addf %14, %16 : vector<1x128xf32>
    %18 = math.rsqrt %17 : vector<1x128xf32>
    %19 = arith.mulf %15, %18 : vector<1x128xf32>
    %c1 = arith.constant 1 : index
    %c0_10 = arith.constant 0 : index
    %20 = vector.load %arg3[%c1, %c0_10] : memref<8x128xf32, #tpu.memory_space<vmem>>, vector<1x128xf32>
    %21 = arith.mulf %7, %19 : vector<1x128xf32>
    %22 = arith.subf %20, %21 : vector<1x128xf32>
    %23 = vector.broadcast %19 : vector<1x128xf32> to vector<8x128xf32>
    %24 = arith.mulf %3, %23 : vector<8x128xf32>
    %25 = vector.broadcast %22 : vector<1x128xf32> to vector<8x128xf32>
    %26 = arith.addf %24, %25 : vector<8x128xf32>
    %27 = vector.extract_strided_slice %26 {offsets = [0, 64], sizes = [8, 64], strides = [1, 1]} : vector<8x128xf32> to vector<8x64xf32>
    %cst_11 = arith.constant 0.000000e+00 : f32
    %28 = vector.broadcast %cst_11 : f32 to vector<8x128xf32>
    %29 = arith.maximumf %26, %28 : vector<8x128xf32>
    %30 = arith.truncf %29 : vector<8x128xf32> to vector<8x128xbf16>
    %c0_12 = arith.constant 0 : index
    %c0_13 = arith.constant 0 : index
    %31 = vector.load %arg2[%c0_12, %c0_13] : memref<128x64xbf16, #tpu.memory_space<vmem>>, vector<128x64xbf16>
    %cst_14 = arith.constant dense<0.000000e+00> : vector<8x64xf32>
    %32 = tpu.matmul %30, %31, %cst_14 {dimension_numbers = #tpu.dot_dimension_numbers<[1], [0], [0], [1], [0, 0, 1, 1], [], []>} : vector<8x128xbf16>, vector<128x64xbf16>, vector<8x64xf32> -> vector<8x64xf32>
    %cst_15 = arith.constant dense<0.000000e+00> : vector<64xf32>
    %33 = vector.multi_reduction <add>, %32, %cst_15 [0] : vector<8x64xf32> to vector<64xf32>
    %34 = vector.shape_cast %33 : vector<64xf32> to vector<1x64xf32>
    %cst_16 = arith.constant 1.250000e-01 : f32
    %35 = vector.broadcast %cst_16 : f32 to vector<1x64xf32>
    %36 = arith.mulf %34, %35 : vector<1x64xf32>
    %37 = arith.mulf %32, %32 : vector<8x64xf32>
    %cst_17 = arith.constant dense<0.000000e+00> : vector<64xf32>
    %38 = vector.multi_reduction <add>, %37, %cst_17 [0] : vector<8x64xf32> to vector<64xf32>
    %39 = vector.shape_cast %38 : vector<64xf32> to vector<1x64xf32>
    %cst_18 = arith.constant 1.250000e-01 : f32
    %40 = vector.broadcast %cst_18 : f32 to vector<1x64xf32>
    %41 = arith.mulf %39, %40 : vector<1x64xf32>
    %42 = arith.mulf %36, %36 : vector<1x64xf32>
    %43 = arith.subf %41, %42 : vector<1x64xf32>
    %c2 = arith.constant 2 : index
    %c0_19 = arith.constant 0 : index
    %44 = vector.load %arg3[%c2, %c0_19] : memref<8x128xf32, #tpu.memory_space<vmem>>, vector<1x64xf32>
    %cst_20 = arith.constant 9.99999974E-6 : f32
    %45 = vector.broadcast %cst_20 : f32 to vector<1x64xf32>
    %46 = arith.addf %43, %45 : vector<1x64xf32>
    %47 = math.rsqrt %46 : vector<1x64xf32>
    %48 = arith.mulf %44, %47 : vector<1x64xf32>
    %c3 = arith.constant 3 : index
    %c0_21 = arith.constant 0 : index
    %49 = vector.load %arg3[%c3, %c0_21] : memref<8x128xf32, #tpu.memory_space<vmem>>, vector<1x64xf32>
    %50 = arith.mulf %36, %48 : vector<1x64xf32>
    %51 = arith.subf %49, %50 : vector<1x64xf32>
    %52 = vector.broadcast %48 : vector<1x64xf32> to vector<8x64xf32>
    %53 = arith.mulf %32, %52 : vector<8x64xf32>
    %54 = vector.broadcast %51 : vector<1x64xf32> to vector<8x64xf32>
    %55 = arith.addf %53, %54 : vector<8x64xf32>
    %56 = arith.addf %55, %27 : vector<8x64xf32>
    %cst_22 = arith.constant 0.000000e+00 : f32
    %57 = vector.broadcast %cst_22 : f32 to vector<8x64xf32>
    %58 = arith.maximumf %56, %57 : vector<8x64xf32>
    %c0_23 = arith.constant 0 : index
    %c0_24 = arith.constant 0 : index
    %59 = vector.load %arg4[%c0_23, %c0_24] : memref<8x64xf32, #tpu.memory_space<vmem>>, vector<8x64xf32>
    tpu.vector_store %arg4[%c0_23, %c0_24], %58 {strides = array<i32>} : memref<8x64xf32, #tpu.memory_space<vmem>>, vector<8x64xf32>,
    return
  }
}

</mosaic_0001>

<llo_original>
// kernel: tpu_custom_call.1
$region0: #{tpu_custom_call.1}
  #allocation0 [shape = 'u32[]', space=smem, size = 0x4, offset = 0x4, fixed_abs, tag = 'smem constant byte address 0x4 - core index']
  #allocation1 [shape = 'u32[144,128]{1,0:T(1,128)}', space=vmem, size = 0x12000, scoped, tag = 'internal scratch']
  %s0 = inlined_call_operand.vmem [shape: f32[8,32], index: 0, kind: input, shape index: {}]
  %s1 = inlined_call_operand.vmem [shape: bf16[32,128], index: 1, kind: input, shape index: {}]
  %s2 = inlined_call_operand.vmem [shape: bf16[128,64], index: 2, kind: input, shape index: {}]
  %s3 = inlined_call_operand.vmem [shape: f32[8,128], index: 3, kind: input, shape index: {}]
  %s4 = inlined_call_operand.hbm [shape: f32[8,64], index: 4, kind: output, shape index: {}]
  %s5 = sld [smem:[#allocation0]]
  $region26: #{tpu_custom_call.1} parent=0
    _
  %s7 = ssub.s32 1, %s5
  %s8 = scalar_select 0, %s7, %s5
  $region1: #{tpu_custom_call.1} parent=0
    #allocation2 [shape = 'u8[4096]{0}', space=vmem, size = 0x1000, scoped, tag = 'output window, operand 0, single buffered']
    #allocation3 [shape = 's32[1]{0}', space=sflag, size = 0x4, scoped, tag = 'scoped memory for tpu_custom_call.1']
    %9 = vsyncpa [#allocation3], 0
    // Predicated region
    $region2: #{tpu_custom_call.1} parent=1 // pred_check
      _
    $region3: #{tpu_custom_call.1} parent=1 // pred_check_branch
      %11 = sbr.rel (0) target = $region5
    $region4: #{tpu_custom_call.1} parent=1 // pred_region
      _
    $region5: #{tpu_custom_call.1} parent=1 // pred_fallthru
      _
    // Predicated region
    $region6: #{tpu_custom_call.1} parent=1 // pred_check
      _
    $region7: #{tpu_custom_call.1} parent=1 // pred_check_branch
      %13 = sbr.rel (0) target = $region9
    $region8: #{tpu_custom_call.1} parent=1 // pred_region
      _
    $region9: #{tpu_custom_call.1} parent=1 // pred_fallthru
      _
    // Predicated region
    $region10: #{tpu_custom_call.1} parent=1 // pred_check
      _
    $region11: #{tpu_custom_call.1} parent=1 // pred_check_branch
      %15 = sbr.rel (0) target = $region13
    $region12: #{tpu_custom_call.1} parent=1 // pred_region
      _
    $region13: #{tpu_custom_call.1} parent=1 // pred_fallthru
      _
    // Predicated region
    $region14: #{tpu_custom_call.1} parent=1 // pred_check
      _
    $region15: #{tpu_custom_call.1} parent=1 // pred_check_branch
      %17 = sbr.rel (0) target = $region17
    $region16: #{tpu_custom_call.1} parent=1 // pred_region
      _
    $region17: #{tpu_custom_call.1} parent=1 // pred_fallthru
      _
    %v19 = vld [vmem:[%s0] sm:$0xff]
    %v20 = vpack.c.bf16 %v19, %v19
    %v21 = vld [vmem:[%s1] sm:$0xf]
    %v22 = vld [vmem:[%s1 + $0x4] sm:$0xf]
    %v23 = vld [vmem:[%s1 + $0x8] sm:$0xf]
    %v24 = vld [vmem:[%s1 + $0xc] sm:$0xf]
    %v29 = vunpack.c.l.b16 %v21
    %v30 = vunpack.c.l.b16 %v22
    %v31 = vunpack.c.l.b16 %v23
    %v32 = vunpack.c.l.b16 %v24
    %v33 = vpack.c.b16 %v30, %v29
    %v34 = vpack.c.b16 %v32, %v31
    %vm37 = vcmask 261120
    %v39 = vsel %vm37, %v20, 0
    %41 = vmatprep.subr.bf16.mxu0 0
    %42 = vmatpush1.bf16.msra.mxu0 %v33
    %43 = vmatprep.subr.bf16.mxu0 0
    %44 = vmatpush1.bf16.msra.mxu0 %v34
    %45 = vmatprep.subr.bf16.mxu0 0
    %46 = vmatpush1.bf16.msra.mxu0 0
    %47 = vmatprep.subr.bf16.mxu0 0
    %48 = vmatpush1.bf16.msra.mxu0 0
    %49 = vmatprep.subr.bf16.mxu0 0
    %50 = vmatpush1.bf16.msra.mxu0 0
    %51 = vmatprep.subr.bf16.mxu0 0
    %52 = vmatpush1.bf16.msra.mxu0 0
    %53 = vmatprep.subr.bf16.mxu0 0
    %54 = vmatpush1.bf16.msra.mxu0 0
    %55 = vmatprep.subr.bf16.mxu0 0
    %56 = vmatpush1.bf16.msra.mxu0 0
    %57 = vmatprep.subr.bf16.mxu0 0
    %58 = vmatpush1.bf16.msra.mxu0 0
    %59 = vmatprep.subr.bf16.mxu0 0
    %60 = vmatpush1.bf16.msra.mxu0 0
    %61 = vmatprep.subr.bf16.mxu0 0
    %62 = vmatpush1.bf16.msra.mxu0 0
    %63 = vmatprep.subr.bf16.mxu0 0
    %64 = vmatpush1.bf16.msra.mxu0 0
    %65 = vmatprep.subr.bf16.mxu0 0
    %66 = vmatpush1.bf16.msra.mxu0 0
    %67 = vmatprep.subr.bf16.mxu0 0
    %68 = vmatpush1.bf16.msra.mxu0 0
    %69 = vmatprep.subr.bf16.mxu0 0
    %70 = vmatpush1.bf16.msra.mxu0 0
    %71 = vmatprep.subr.bf16.mxu0 0
    %72 = vmatpush1.bf16.msra.mxu0 0
    %73 = vmatprep.mubr.bf16.mxu0 0
    %74 = vmatmul.mubr.bf16.gmra.mrb[0].mxu0 %v39
    %v75 = vpop.f32.mrb[0].mxu0
    %v76 = vadd.f32 0.0, %v75
    %v77 = vpop.f32.mrb[0].mxu0
    %v78 = vpop.f32.mrb[0].mxu0
    %v79 = vpop.f32.mrb[0].mxu0
    %80 = vdwg.mxu0
    %v81 = vrot.slane %v76, 4
    %v82 = vadd.f32 %v76, %v81
    %v83 = vrot.slane %v82, 2
    %v84 = vadd.f32 %v82, %v83
    %v85 = vrot.slane %v84, 1
    %v86 = vadd.f32 %v84, %v85
    %v87 = vmul.f32 %v86, 0.125
    %v88 = vmul.f32 %v76, %v76
    %v89 = vrot.slane %v88, 4
    %v90 = vadd.f32 %v88, %v89
    %v91 = vrot.slane %v90, 2
    %v92 = vadd.f32 %v90, %v91
    %v93 = vrot.slane %v92, 1
    %v94 = vadd.f32 %v92, %v93
    %v95 = vmul.f32 %v94, 0.125
    %v96 = vmul.f32 %v87, %v87
    %v97 = vsub.f32 %v95, %v96
    %v98 = vld [vmem:[%s3] sm:$0x1]
    %v99 = vadd.f32 %v97, 1e-05
    %v100 = vrsqrt.pop %v99
    %v101 = vmul.f32 %v98, %v100
    %v102 = vld [vmem:[%s3 + $0x1] sm:$0x1]
    %v103 = vmul.f32 %v87, %v101
    %v104 = vsub.f32 %v102, %v103
    %v105 = vlaneseq
    %v106 = vshrl.u32 %v105, 7
    %v107 = vsub.s32 0, %v106
    %v108 = vrot.slane %v101, %v107
    %v109 = vmul.f32 %v76, %v108
    %v110 = vlaneseq
    %v111 = vshrl.u32 %v110, 7
    %v112 = vsub.s32 0, %v111
    %v113 = vrot.slane %v104, %v112
    %v114 = vadd.f32 %v109, %v113
    %v115 = vmax.f32 %v114, 0.0
    %v116 = vpack.c.bf16 %v115, %v115
    %v117 = vld [vmem:[%s2] sm:$0xf]
    %v118 = vld [vmem:[%s2 + $0x4] sm:$0xf]
    %v119 = vld [vmem:[%s2 + $0x8] sm:$0xf]
    %v120 = vld [vmem:[%s2 + $0xc] sm:$0xf]
    %v121 = vld [vmem:[%s2 + $0x10] sm:$0xf]
    %v122 = vld [vmem:[%s2 + $0x14] sm:$0xf]
    %v123 = vld [vmem:[%s2 + $0x18] sm:$0xf]
    %v124 = vld [vmem:[%s2 + $0x1c] sm:$0xf]
    %v125 = vld [vmem:[%s2 + $0x20] sm:$0xf]
    %v126 = vld [vmem:[%s2 + $0x24] sm:$0xf]
    %v127 = vld [vmem:[%s2 + $0x28] sm:$0xf]
    %v128 = vld [vmem:[%s2 + $0x2c] sm:$0xf]
    %v129 = vld [vmem:[%s2 + $0x30] sm:$0xf]
    %v130 = vld [vmem:[%s2 + $0x34] sm:$0xf]
    %v131 = vld [vmem:[%s2 + $0x38] sm:$0xf]
    %v132 = vld [vmem:[%s2 + $0x3c] sm:$0xf]
    %v149 = vunpack.c.l.b16 %v117
    %v150 = vunpack.c.l.b16 %v118
    %v151 = vunpack.c.l.b16 %v119
    %v152 = vunpack.c.l.b16 %v120
    %v153 = vunpack.c.l.b16 %v121
    %v154 = vunpack.c.l.b16 %v122
    %v155 = vunpack.c.l.b16 %v123
    %v156 = vunpack.c.l.b16 %v124
    %v157 = vunpack.c.l.b16 %v125
    %v158 = vunpack.c.l.b16 %v126
    %v159 = vunpack.c.l.b16 %v127
    %v160 = vunpack.c.l.b16 %v128
    %v161 = vunpack.c.l.b16 %v129
    %v162 = vunpack.c.l.b16 %v130
    %v163 = vunpack.c.l.b16 %v131
    %v164 = vunpack.c.l.b16 %v132
    %v165 = vpack.c.b16 %v150, %v149
    %v166 = vpack.c.b16 %v152, %v151
    %v167 = vpack.c.b16 %v154, %v153
    %v168 = vpack.c.b16 %v156, %v155
    %v169 = vpack.c.b16 %v158, %v157
    %v170 = vpack.c.b16 %v160, %v159
    %v171 = vpack.c.b16 %v162, %v161
    %v172 = vpack.c.b16 %v164, %v163
    %181 = vmatprep.subr.bf16.mxu0 0
    %182 = vmatpush1.bf16.msra.mxu0 %v165
    %183 = vmatprep.subr.bf16.mxu0 0
    %184 = vmatpush1.bf16.msra.mxu0 %v166
    %185 = vmatprep.subr.bf16.mxu0 0
    %186 = vmatpush1.bf16.msra.mxu0 %v167
    %187 = vmatprep.subr.bf16.mxu0 0
    %188 = vmatpush1.bf16.msra.mxu0 %v168
    %189 = vmatprep.subr.bf16.mxu0 0
    %190 = vmatpush1.bf16.msra.mxu0 %v169
    %191 = vmatprep.subr.bf16.mxu0 0
    %192 = vmatpush1.bf16.msra.mxu0 %v170
    %193 = vmatprep.subr.bf16.mxu0 0
    %194 = vmatpush1.bf16.msra.mxu0 %v171
    %195 = vmatprep.subr.bf16.mxu0 0
    %196 = vmatpush1.bf16.msra.mxu0 %v172
    %197 = vmatprep.subr.bf16.mxu0 0
    %198 = vmatpush1.bf16.msra.mxu0 0
    %199 = vmatprep.subr.bf16.mxu0 0
    %200 = vmatpush1.bf16.msra.mxu0 0
    %201 = vmatprep.subr.bf16.mxu0 0
    %202 = vmatpush1.bf16.msra.mxu0 0
    %203 = vmatprep.subr.bf16.mxu0 0
    %204 = vmatpush1.bf16.msra.mxu0 0
    %205 = vmatprep.subr.bf16.mxu0 0
    %206 = vmatpush1.bf16.msra.mxu0 0
    %207 = vmatprep.subr.bf16.mxu0 0
    %208 = vmatpush1.bf16.msra.mxu0 0
    %209 = vmatprep.subr.bf16.mxu0 0
    %210 = vmatpush1.bf16.msra.mxu0 0
    %211 = vmatprep.subr.bf16.mxu0 0
    %212 = vmatpush1.bf16.msra.mxu0 0
    %213 = vmatprep.mubr.bf16.mxu0 0
    %214 = vmatmul.mubr.bf16.gmra.mrb[0].mxu0 %v116
    %v215 = vpop.f32.mrb[0].mxu0
    %v216 = vadd.f32 0.0, %v215
    %v217 = vpop.f32.mrb[0].mxu0
    %v218 = vpop.f32.mrb[0].mxu0
    %v219 = vpop.f32.mrb[0].mxu0
    %220 = vdwg.mxu0
    %vm221 = vcmask 523264
    %v222 = vsel %vm221, %v216, 0.0
    %v223 = vrot.slane %v222, 4
    %v224 = vadd.f32 %v222, %v223
    %v225 = vrot.slane %v224, 2
    %v226 = vadd.f32 %v224, %v225
    %v227 = vrot.slane %v226, 1
    %v228 = vadd.f32 %v226, %v227
    %v229 = vmul.f32 %v228, 0.125
    %v230 = vmul.f32 %v216, %v216
    %v231 = vsel %vm221, %v230, 0.0
    %v232 = vrot.slane %v231, 4
    %v233 = vadd.f32 %v231, %v232
    %v234 = vrot.slane %v233, 2
    %v235 = vadd.f32 %v233, %v234
    %v236 = vrot.slane %v235, 1
    %v237 = vadd.f32 %v235, %v236
    %v238 = vmul.f32 %v237, 0.125
    %v239 = vmul.f32 %v229, %v229
    %v240 = vsub.f32 %v238, %v239
    %v241 = vld [vmem:[%s3 + $0x2] sm:$0x1]
    %v242 = vadd.f32 %v240, 1e-05
    %v243 = vrsqrt.pop %v242
    %v244 = vmul.f32 %v241, %v243
    %v245 = vld [vmem:[%s3 + $0x3] sm:$0x1]
    %v246 = vmul.f32 %v229, %v244
    %v247 = vsub.f32 %v245, %v246
    %v248 = vlaneseq
    %v249 = vshrl.u32 %v248, 7
    %v250 = vsub.s32 0, %v249
    %v251 = vrot.slane %v244, %v250
    %v252 = vmul.f32 %v216, %v251
    %v253 = vlaneseq
    %v254 = vshrl.u32 %v253, 7
    %v255 = vsub.s32 0, %v254
    %v256 = vrot.slane %v247, %v255
    %v257 = vadd.f32 %v252, %v256
    %259 = vrot.lane.b32.xlu0 %v114, 64
    %v260 = vpop.permute.xlu0 %259
    %v262 = vadd.f32 %v257, %v260
    %v263 = vmax.f32 %v262, 0.0
    %264 = vst.msk [vmem:[#allocation2] sm:$0xff] %vm221, %v263
    // Predicated region
    $region18: #{tpu_custom_call.1} parent=1 // pred_check
      _
    $region19: #{tpu_custom_call.1} parent=1 // pred_check_branch
      %266 = sbr.rel (0) target = $region21
    $region20: #{tpu_custom_call.1} parent=1 // pred_region
      %s268 = ssub.s32 128, 128
      %269 = vsyncadd [#allocation3], %s268
      %s271 = sshll.u32 [#allocation2], 4
      %s272 = int_to_ptr.vmem [resolvable:$true] %s271
      %274 = dma.vmem_to_hbm [thread:$0]  %s272, 128, %s4, [#allocation3]
    $region21: #{tpu_custom_call.1} parent=1 // pred_fallthru
      _
    // Predicated region
    $region22: #{tpu_custom_call.1} parent=1 // pred_check
      _
    $region23: #{tpu_custom_call.1} parent=1 // pred_check_branch
      %276 = sbr.rel (0) target = $region25
    $region24: #{tpu_custom_call.1} parent=1 // pred_region
      %277 = dma.done [#allocation3], 128
    $region25: #{tpu_custom_call.1} parent=1 // pred_fallthru
      _
    %278 = vsyncpa [#allocation3], 1

</llo_original>
